<compile_context>
chip_gen: v7x
topology: tpu7x:2x2x1
jax: 0.10.0
libtpu: 0.0.40
codegen_flags: <defaults>
</compile_context>

<pallas_src>
import math

import jax
import jax.numpy as jnp
from jax.experimental import pallas as pl
from jax.experimental.pallas import tpu as pltpu


# -----------------------------------------------------------------------------
# Fused Pallas kernel: the whole NormalizingFlow forward in one invocation
# -----------------------------------------------------------------------------
def _flow_kernel(x_a_ref, x_b_ref,
                 w1_ref, b1_ref, w2_ref, b2_ref, w3_ref, b3_ref,
                 z_b_ref, ldj_ref):
    n_flows = w1_ref.shape[0]
    db = x_b_ref.shape[1]

    x_a = x_a_ref[...]                 # (B, Da) — conditioning half, constant across layers
    z_b = x_b_ref[...]                 # (B, Db) — running coupling state (carried in vregs)
    ldj_acc = jnp.zeros(x_b_ref.shape, jnp.float32)   # elementwise (VPU) accumulator

    # n_flows is tiny and all layer weights are VMEM-resident: static unroll, no grid,
    # no per-layer DMA traffic.
    for l in range(n_flows):
        h = jnp.maximum(
            jnp.dot(x_a, w1_ref[l], preferred_element_type=jnp.float32) + b1_ref[l], 0.0)
        h = jnp.maximum(
            jnp.dot(h, w2_ref[l], preferred_element_type=jnp.float32) + b2_ref[l], 0.0)
        # Fused (H, 2*Db) [log_scale | shift] matmul — one MXU op instead of two narrow ones.
        st = jnp.dot(h, w3_ref[l], preferred_element_type=jnp.float32) + b3_ref[l]
        log_scale = st[:, :db]
        shift = st[:, db:]

        # Affine coupling update of the running z_b state.
        z_b = z_b * jnp.exp(log_scale) + shift
        # Deferred log-det: accumulate elementwise, reduce once at the end.
        ldj_acc = ldj_acc + log_scale

    z_b_ref[...] = z_b
    # Single cross-lane reduce + single (B, 1) store for the whole flow.
    ldj_ref[...] = jnp.sum(ldj_acc, axis=1, keepdims=True)


# -----------------------------------------------------------------------------
# Wrapper: one gridless pallas_call for the whole NormalizingFlow forward
# -----------------------------------------------------------------------------
def normalizing_flow_forward(x, params):
    """Stack of affine-coupling layers; returns (z, log_det_jac)."""
    B, D = x.shape
    split_dim = D // 2
    db = D - split_dim

    # Split on the feature dim in the wrapper (free layout plumbing; the kernel then only
    # does full-tile loads/stores and no lane-offset slicing of the input).
    x_a = x[:, :split_dim]
    x_b = x[:, split_dim:]

    def vmem():
        return pl.BlockSpec(memory_space=pltpu.MemorySpace.VMEM)

    z_b, ldj = pl.pallas_call(
        _flow_kernel,
        out_shape=(jax.ShapeDtypeStruct((B, db), jnp.float32),
                   jax.ShapeDtypeStruct((B, 1), jnp.float32)),
        in_specs=[vmem() for _ in range(8)],
        out_specs=(vmem(), vmem()),
    )(x_a, x_b,
      params["w1"], params["b1"], params["w2"], params["b2"],
      params["w3"], params["b3"])

    # z_a is never modified by the flow (same split every layer, no permutation between
    # couplings — matches the PyTorch module), so reassemble here instead of round-tripping
    # x_a through an output VMEM block.
    z = jnp.concatenate([x_a, z_b], axis=1)
    return z, ldj[:, 0]


# -----------------------------------------------------------------------------
# Deterministic parameter initialization (weights stacked over layers)
# -----------------------------------------------------------------------------
def init_params(key, input_dim, n_flows, hidden_dim):
    # NOTE: PyTorch zero-inits the last Linear (identity flow at init). We use small
    # random weights everywhere so the kernel exercises the full compute path; shapes /
    # math match the module exactly (Linear stored (in, out): x @ W + b, final layer's
    # columns laid out as [log_scale | shift] to mirror params.chunk(2, dim=1)).
    split_dim = input_dim // 2
    db = input_dim - split_dim

    def uni(k, shape, fan_in):
        bound = 1.0 / math.sqrt(fan_in)
        return jax.random.uniform(k, shape, jnp.float32, -bound, bound)

    ks = jax.random.split(key, 6)
    return {
        "w1": uni(ks[0], (n_flows, split_dim, hidden_dim), split_dim),
        "b1": uni(ks[1], (n_flows, 1, hidden_dim), split_dim),
        "w2": uni(ks[2], (n_flows, hidden_dim, hidden_dim), hidden_dim),
        "b2": uni(ks[3], (n_flows, 1, hidden_dim), hidden_dim),
        "w3": uni(ks[4], (n_flows, hidden_dim, 2 * db), hidden_dim),
        "b3": uni(ks[5], (n_flows, 1, 2 * db), hidden_dim),
    }


# -----------------------------------------------------------------------------
# Pure-JAX reference (for correctness check)
# -----------------------------------------------------------------------------
def reference_forward(x, params):
    D = x.shape[1]
    split_dim = D // 2
    db = D - split_dim
    n_flows = params["w1"].shape[0]
    log_det_jac = jnp.zeros((x.shape[0],), dtype=jnp.float32)
    z = x
    for l in range(n_flows):
        x_a, x_b = z[:, :split_dim], z[:, split_dim:]
        h = jnp.maximum(x_a @ params["w1"][l] + params["b1"][l], 0.0)
        h = jnp.maximum(h @ params["w2"][l] + params["b2"][l], 0.0)
        st = h @ params["w3"][l] + params["b3"][l]
        log_scale, shift = st[:, :db], st[:, db:]
        z_b = x_b * jnp.exp(log_scale) + shift
        z = jnp.concatenate([x_a, z_b], axis=1)
        log_det_jac = log_det_jac + jnp.sum(log_scale, axis=1)
    return z, log_det_jac


# -----------------------------------------------------------------------------
# Main
# -----------------------------------------------------------------------------
if __name__ == "__main__":
    B, INPUT_DIM, N_FLOWS, HIDDEN_DIM = 8, 16, 4, 32

    key = jax.random.PRNGKey(0)
    kx, kp = jax.random.split(key)
    x = jax.random.normal(kx, (B, INPUT_DIM), dtype=jnp.float32)
    params = init_params(kp, INPUT_DIM, N_FLOWS, HIDDEN_DIM)

    fwd = jax.jit(normalizing_flow_forward)
    z, ldj = fwd(x, params)
    z = jax.block_until_ready(z)
    ldj = jax.block_until_ready(ldj)

    z_ref, ldj_ref = reference_forward(x, params)
    assert jnp.allclose(z, z_ref, atol=1e-5, rtol=1e-5), "z mismatch vs reference"
    assert jnp.allclose(ldj, ldj_ref, atol=1e-5, rtol=1e-5), "log_det_jac mismatch"

    print("KERNEL_OK")
</pallas_src>

<mosaic_0001>
module attributes {stable_mosaic.version = 11 : i64} {
  func.func @_flow_kernel(%arg0: memref<8x8xf32, #tpu.memory_space<vmem>>, %arg1: memref<8x8xf32, #tpu.memory_space<vmem>>, %arg2: memref<4x8x32xf32, #tpu.memory_space<vmem>>, %arg3: memref<4x1x32xf32, #tpu.memory_space<vmem>>, %arg4: memref<4x32x32xf32, #tpu.memory_space<vmem>>, %arg5: memref<4x1x32xf32, #tpu.memory_space<vmem>>, %arg6: memref<4x32x16xf32, #tpu.memory_space<vmem>>, %arg7: memref<4x1x16xf32, #tpu.memory_space<vmem>>, %arg8: memref<8x8xf32, #tpu.memory_space<vmem>>, %arg9: memref<8x1xf32, #tpu.memory_space<vmem>>) attributes {dimension_semantics = [], scalar_prefetch = 0 : i64, scratch_operands = 0 : i64, tpu.core_type = #tpu.core_type<tc>} {
    %c0 = arith.constant 0 : index
    %c0_0 = arith.constant 0 : index
    %0 = vector.load %arg0[%c0, %c0_0] : memref<8x8xf32, #tpu.memory_space<vmem>>, vector<8x8xf32>
    %c0_1 = arith.constant 0 : index
    %c0_2 = arith.constant 0 : index
    %1 = vector.load %arg1[%c0_1, %c0_2] : memref<8x8xf32, #tpu.memory_space<vmem>>, vector<8x8xf32>
    %cst = arith.constant 0.000000e+00 : f32
    %2 = vector.broadcast %cst : f32 to vector<8x8xf32>
    %c0_3 = arith.constant 0 : index
    %c0_4 = arith.constant 0 : index
    %c0_5 = arith.constant 0 : index
    %3 = vector.load %arg2[%c0_3, %c0_4, %c0_5] : memref<4x8x32xf32, #tpu.memory_space<vmem>>, vector<1x8x32xf32>
    %4 = vector.shape_cast %3 : vector<1x8x32xf32> to vector<8x32xf32>
    %cst_6 = arith.constant dense<0.000000e+00> : vector<8x32xf32>
    %5 = tpu.matmul %0, %4, %cst_6 {dimension_numbers = #tpu.dot_dimension_numbers<[1], [0], [0], [1], [0, 0, 1, 1], [], []>} : vector<8x8xf32>, vector<8x32xf32>, vector<8x32xf32> -> vector<8x32xf32>
    %c0_7 = arith.constant 0 : index
    %c0_8 = arith.constant 0 : index
    %c0_9 = arith.constant 0 : index
    %6 = vector.load %arg3[%c0_7, %c0_8, %c0_9] : memref<4x1x32xf32, #tpu.memory_space<vmem>>, vector<1x1x32xf32>
    %7 = vector.shape_cast %6 : vector<1x1x32xf32> to vector<1x32xf32>
    %8 = vector.broadcast %7 : vector<1x32xf32> to vector<8x32xf32>
    %9 = arith.addf %5, %8 : vector<8x32xf32>
    %cst_10 = arith.constant 0.000000e+00 : f32
    %10 = vector.broadcast %cst_10 : f32 to vector<8x32xf32>
    %11 = arith.maximumf %9, %10 : vector<8x32xf32>
    %c0_11 = arith.constant 0 : index
    %c0_12 = arith.constant 0 : index
    %c0_13 = arith.constant 0 : index
    %12 = vector.load %arg4[%c0_11, %c0_12, %c0_13] : memref<4x32x32xf32, #tpu.memory_space<vmem>>, vector<1x32x32xf32>
    %13 = vector.shape_cast %12 : vector<1x32x32xf32> to vector<32x32xf32>
    %cst_14 = arith.constant dense<0.000000e+00> : vector<8x32xf32>
    %14 = tpu.matmul %11, %13, %cst_14 {dimension_numbers = #tpu.dot_dimension_numbers<[1], [0], [0], [1], [0, 0, 1, 1], [], []>} : vector<8x32xf32>, vector<32x32xf32>, vector<8x32xf32> -> vector<8x32xf32>
    %c0_15 = arith.constant 0 : index
    %c0_16 = arith.constant 0 : index
    %c0_17 = arith.constant 0 : index
    %15 = vector.load %arg5[%c0_15, %c0_16, %c0_17] : memref<4x1x32xf32, #tpu.memory_space<vmem>>, vector<1x1x32xf32>
    %16 = vector.shape_cast %15 : vector<1x1x32xf32> to vector<1x32xf32>
    %17 = vector.broadcast %16 : vector<1x32xf32> to vector<8x32xf32>
    %18 = arith.addf %14, %17 : vector<8x32xf32>
    %cst_18 = arith.constant 0.000000e+00 : f32
    %19 = vector.broadcast %cst_18 : f32 to vector<8x32xf32>
    %20 = arith.maximumf %18, %19 : vector<8x32xf32>
    %c0_19 = arith.constant 0 : index
    %c0_20 = arith.constant 0 : index
    %c0_21 = arith.constant 0 : index
    %21 = vector.load %arg6[%c0_19, %c0_20, %c0_21] : memref<4x32x16xf32, #tpu.memory_space<vmem>>, vector<1x32x16xf32>
    %22 = vector.shape_cast %21 : vector<1x32x16xf32> to vector<32x16xf32>
    %cst_22 = arith.constant dense<0.000000e+00> : vector<8x16xf32>
    %23 = tpu.matmul %20, %22, %cst_22 {dimension_numbers = #tpu.dot_dimension_numbers<[1], [0], [0], [1], [0, 0, 1, 1], [], []>} : vector<8x32xf32>, vector<32x16xf32>, vector<8x16xf32> -> vector<8x16xf32>
    %c0_23 = arith.constant 0 : index
    %c0_24 = arith.constant 0 : index
    %c0_25 = arith.constant 0 : index
    %24 = vector.load %arg7[%c0_23, %c0_24, %c0_25] : memref<4x1x16xf32, #tpu.memory_space<vmem>>, vector<1x1x16xf32>
    %25 = vector.shape_cast %24 : vector<1x1x16xf32> to vector<1x16xf32>
    %26 = vector.broadcast %25 : vector<1x16xf32> to vector<8x16xf32>
    %27 = arith.addf %23, %26 : vector<8x16xf32>
    %28 = vector.extract_strided_slice %27 {offsets = [0, 0], sizes = [8, 8], strides = [1, 1]} : vector<8x16xf32> to vector<8x8xf32>
    %29 = vector.extract_strided_slice %27 {offsets = [0, 8], sizes = [8, 8], strides = [1, 1]} : vector<8x16xf32> to vector<8x8xf32>
    %30 = math.exp %28 : vector<8x8xf32>
    %31 = arith.mulf %1, %30 : vector<8x8xf32>
    %32 = arith.addf %31, %29 : vector<8x8xf32>
    %33 = arith.addf %2, %28 : vector<8x8xf32>
    %c1 = arith.constant 1 : index
    %c0_26 = arith.constant 0 : index
    %c0_27 = arith.constant 0 : index
    %34 = vector.load %arg2[%c1, %c0_26, %c0_27] : memref<4x8x32xf32, #tpu.memory_space<vmem>>, vector<1x8x32xf32>
    %35 = vector.shape_cast %34 : vector<1x8x32xf32> to vector<8x32xf32>
    %cst_28 = arith.constant dense<0.000000e+00> : vector<8x32xf32>
    %36 = tpu.matmul %0, %35, %cst_28 {dimension_numbers = #tpu.dot_dimension_numbers<[1], [0], [0], [1], [0, 0, 1, 1], [], []>} : vector<8x8xf32>, vector<8x32xf32>, vector<8x32xf32> -> vector<8x32xf32>
    %c1_29 = arith.constant 1 : index
    %c0_30 = arith.constant 0 : index
    %c0_31 = arith.constant 0 : index
    %37 = vector.load %arg3[%c1_29, %c0_30, %c0_31] : memref<4x1x32xf32, #tpu.memory_space<vmem>>, vector<1x1x32xf32>
    %38 = vector.shape_cast %37 : vector<1x1x32xf32> to vector<1x32xf32>
    %39 = vector.broadcast %38 : vector<1x32xf32> to vector<8x32xf32>
    %40 = arith.addf %36, %39 : vector<8x32xf32>
    %cst_32 = arith.constant 0.000000e+00 : f32
    %41 = vector.broadcast %cst_32 : f32 to vector<8x32xf32>
    %42 = arith.maximumf %40, %41 : vector<8x32xf32>
    %c1_33 = arith.constant 1 : index
    %c0_34 = arith.constant 0 : index
    %c0_35 = arith.constant 0 : index
    %43 = vector.load %arg4[%c1_33, %c0_34, %c0_35] : memref<4x32x32xf32, #tpu.memory_space<vmem>>, vector<1x32x32xf32>
    %44 = vector.shape_cast %43 : vector<1x32x32xf32> to vector<32x32xf32>
    %cst_36 = arith.constant dense<0.000000e+00> : vector<8x32xf32>
    %45 = tpu.matmul %42, %44, %cst_36 {dimension_numbers = #tpu.dot_dimension_numbers<[1], [0], [0], [1], [0, 0, 1, 1], [], []>} : vector<8x32xf32>, vector<32x32xf32>, vector<8x32xf32> -> vector<8x32xf32>
    %c1_37 = arith.constant 1 : index
    %c0_38 = arith.constant 0 : index
    %c0_39 = arith.constant 0 : index
    %46 = vector.load %arg5[%c1_37, %c0_38, %c0_39] : memref<4x1x32xf32, #tpu.memory_space<vmem>>, vector<1x1x32xf32>
    %47 = vector.shape_cast %46 : vector<1x1x32xf32> to vector<1x32xf32>
    %48 = vector.broadcast %47 : vector<1x32xf32> to vector<8x32xf32>
    %49 = arith.addf %45, %48 : vector<8x32xf32>
    %cst_40 = arith.constant 0.000000e+00 : f32
    %50 = vector.broadcast %cst_40 : f32 to vector<8x32xf32>
    %51 = arith.maximumf %49, %50 : vector<8x32xf32>
    %c1_41 = arith.constant 1 : index
    %c0_42 = arith.constant 0 : index
    %c0_43 = arith.constant 0 : index
    %52 = vector.load %arg6[%c1_41, %c0_42, %c0_43] : memref<4x32x16xf32, #tpu.memory_space<vmem>>, vector<1x32x16xf32>
    %53 = vector.shape_cast %52 : vector<1x32x16xf32> to vector<32x16xf32>
    %cst_44 = arith.constant dense<0.000000e+00> : vector<8x16xf32>
    %54 = tpu.matmul %51, %53, %cst_44 {dimension_numbers = #tpu.dot_dimension_numbers<[1], [0], [0], [1], [0, 0, 1, 1], [], []>} : vector<8x32xf32>, vector<32x16xf32>, vector<8x16xf32> -> vector<8x16xf32>
    %c1_45 = arith.constant 1 : index
    %c0_46 = arith.constant 0 : index
    %c0_47 = arith.constant 0 : index
    %55 = vector.load %arg7[%c1_45, %c0_46, %c0_47] : memref<4x1x16xf32, #tpu.memory_space<vmem>>, vector<1x1x16xf32>
    %56 = vector.shape_cast %55 : vector<1x1x16xf32> to vector<1x16xf32>
    %57 = vector.broadcast %56 : vector<1x16xf32> to vector<8x16xf32>
    %58 = arith.addf %54, %57 : vector<8x16xf32>
    %59 = vector.extract_strided_slice %58 {offsets = [0, 0], sizes = [8, 8], strides = [1, 1]} : vector<8x16xf32> to vector<8x8xf32>
    %60 = vector.extract_strided_slice %58 {offsets = [0, 8], sizes = [8, 8], strides = [1, 1]} : vector<8x16xf32> to vector<8x8xf32>
    %61 = math.exp %59 : vector<8x8xf32>
    %62 = arith.mulf %32, %61 : vector<8x8xf32>
    %63 = arith.addf %62, %60 : vector<8x8xf32>
    %64 = arith.addf %33, %59 : vector<8x8xf32>
    %c2 = arith.constant 2 : index
    %c0_48 = arith.constant 0 : index
    %c0_49 = arith.constant 0 : index
    %65 = vector.load %arg2[%c2, %c0_48, %c0_49] : memref<4x8x32xf32, #tpu.memory_space<vmem>>, vector<1x8x32xf32>
    %66 = vector.shape_cast %65 : vector<1x8x32xf32> to vector<8x32xf32>
    %cst_50 = arith.constant dense<0.000000e+00> : vector<8x32xf32>
    %67 = tpu.matmul %0, %66, %cst_50 {dimension_numbers = #tpu.dot_dimension_numbers<[1], [0], [0], [1], [0, 0, 1, 1], [], []>} : vector<8x8xf32>, vector<8x32xf32>, vector<8x32xf32> -> vector<8x32xf32>
    %c2_51 = arith.constant 2 : index
    %c0_52 = arith.constant 0 : index
    %c0_53 = arith.constant 0 : index
    %68 = vector.load %arg3[%c2_51, %c0_52, %c0_53] : memref<4x1x32xf32, #tpu.memory_space<vmem>>, vector<1x1x32xf32>
    %69 = vector.shape_cast %68 : vector<1x1x32xf32> to vector<1x32xf32>
    %70 = vector.broadcast %69 : vector<1x32xf32> to vector<8x32xf32>
    %71 = arith.addf %67, %70 : vector<8x32xf32>
    %cst_54 = arith.constant 0.000000e+00 : f32
    %72 = vector.broadcast %cst_54 : f32 to vector<8x32xf32>
    %73 = arith.maximumf %71, %72 : vector<8x32xf32>
    %c2_55 = arith.constant 2 : index
    %c0_56 = arith.constant 0 : index
    %c0_57 = arith.constant 0 : index
    %74 = vector.load %arg4[%c2_55, %c0_56, %c0_57] : memref<4x32x32xf32, #tpu.memory_space<vmem>>, vector<1x32x32xf32>
    %75 = vector.shape_cast %74 : vector<1x32x32xf32> to vector<32x32xf32>
    %cst_58 = arith.constant dense<0.000000e+00> : vector<8x32xf32>
    %76 = tpu.matmul %73, %75, %cst_58 {dimension_numbers = #tpu.dot_dimension_numbers<[1], [0], [0], [1], [0, 0, 1, 1], [], []>} : vector<8x32xf32>, vector<32x32xf32>, vector<8x32xf32> -> vector<8x32xf32>
    %c2_59 = arith.constant 2 : index
    %c0_60 = arith.constant 0 : index
    %c0_61 = arith.constant 0 : index
    %77 = vector.load %arg5[%c2_59, %c0_60, %c0_61] : memref<4x1x32xf32, #tpu.memory_space<vmem>>, vector<1x1x32xf32>
    %78 = vector.shape_cast %77 : vector<1x1x32xf32> to vector<1x32xf32>
    %79 = vector.broadcast %78 : vector<1x32xf32> to vector<8x32xf32>
    %80 = arith.addf %76, %79 : vector<8x32xf32>
    %cst_62 = arith.constant 0.000000e+00 : f32
    %81 = vector.broadcast %cst_62 : f32 to vector<8x32xf32>
    %82 = arith.maximumf %80, %81 : vector<8x32xf32>
    %c2_63 = arith.constant 2 : index
    %c0_64 = arith.constant 0 : index
    %c0_65 = arith.constant 0 : index
    %83 = vector.load %arg6[%c2_63, %c0_64, %c0_65] : memref<4x32x16xf32, #tpu.memory_space<vmem>>, vector<1x32x16xf32>
    %84 = vector.shape_cast %83 : vector<1x32x16xf32> to vector<32x16xf32>
    %cst_66 = arith.constant dense<0.000000e+00> : vector<8x16xf32>
    %85 = tpu.matmul %82, %84, %cst_66 {dimension_numbers = #tpu.dot_dimension_numbers<[1], [0], [0], [1], [0, 0, 1, 1], [], []>} : vector<8x32xf32>, vector<32x16xf32>, vector<8x16xf32> -> vector<8x16xf32>
    %c2_67 = arith.constant 2 : index
    %c0_68 = arith.constant 0 : index
    %c0_69 = arith.constant 0 : index
    %86 = vector.load %arg7[%c2_67, %c0_68, %c0_69] : memref<4x1x16xf32, #tpu.memory_space<vmem>>, vector<1x1x16xf32>
    %87 = vector.shape_cast %86 : vector<1x1x16xf32> to vector<1x16xf32>
    %88 = vector.broadcast %87 : vector<1x16xf32> to vector<8x16xf32>
    %89 = arith.addf %85, %88 : vector<8x16xf32>
    %90 = vector.extract_strided_slice %89 {offsets = [0, 0], sizes = [8, 8], strides = [1, 1]} : vector<8x16xf32> to vector<8x8xf32>
    %91 = vector.extract_strided_slice %89 {offsets = [0, 8], sizes = [8, 8], strides = [1, 1]} : vector<8x16xf32> to vector<8x8xf32>
    %92 = math.exp %90 : vector<8x8xf32>
    %93 = arith.mulf %63, %92 : vector<8x8xf32>
    %94 = arith.addf %93, %91 : vector<8x8xf32>
    %95 = arith.addf %64, %90 : vector<8x8xf32>
    %c3 = arith.constant 3 : index
    %c0_70 = arith.constant 0 : index
    %c0_71 = arith.constant 0 : index
    %96 = vector.load %arg2[%c3, %c0_70, %c0_71] : memref<4x8x32xf32, #tpu.memory_space<vmem>>, vector<1x8x32xf32>
    %97 = vector.shape_cast %96 : vector<1x8x32xf32> to vector<8x32xf32>
    %cst_72 = arith.constant dense<0.000000e+00> : vector<8x32xf32>
    %98 = tpu.matmul %0, %97, %cst_72 {dimension_numbers = #tpu.dot_dimension_numbers<[1], [0], [0], [1], [0, 0, 1, 1], [], []>} : vector<8x8xf32>, vector<8x32xf32>, vector<8x32xf32> -> vector<8x32xf32>
    %c3_73 = arith.constant 3 : index
    %c0_74 = arith.constant 0 : index
    %c0_75 = arith.constant 0 : index
    %99 = vector.load %arg3[%c3_73, %c0_74, %c0_75] : memref<4x1x32xf32, #tpu.memory_space<vmem>>, vector<1x1x32xf32>
    %100 = vector.shape_cast %99 : vector<1x1x32xf32> to vector<1x32xf32>
    %101 = vector.broadcast %100 : vector<1x32xf32> to vector<8x32xf32>
    %102 = arith.addf %98, %101 : vector<8x32xf32>
    %cst_76 = arith.constant 0.000000e+00 : f32
    %103 = vector.broadcast %cst_76 : f32 to vector<8x32xf32>
    %104 = arith.maximumf %102, %103 : vector<8x32xf32>
    %c3_77 = arith.constant 3 : index
    %c0_78 = arith.constant 0 : index
    %c0_79 = arith.constant 0 : index
    %105 = vector.load %arg4[%c3_77, %c0_78, %c0_79] : memref<4x32x32xf32, #tpu.memory_space<vmem>>, vector<1x32x32xf32>
    %106 = vector.shape_cast %105 : vector<1x32x32xf32> to vector<32x32xf32>
    %cst_80 = arith.constant dense<0.000000e+00> : vector<8x32xf32>
    %107 = tpu.matmul %104, %106, %cst_80 {dimension_numbers = #tpu.dot_dimension_numbers<[1], [0], [0], [1], [0, 0, 1, 1], [], []>} : vector<8x32xf32>, vector<32x32xf32>, vector<8x32xf32> -> vector<8x32xf32>
    %c3_81 = arith.constant 3 : index
    %c0_82 = arith.constant 0 : index
    %c0_83 = arith.constant 0 : index
    %108 = vector.load %arg5[%c3_81, %c0_82, %c0_83] : memref<4x1x32xf32, #tpu.memory_space<vmem>>, vector<1x1x32xf32>
    %109 = vector.shape_cast %108 : vector<1x1x32xf32> to vector<1x32xf32>
    %110 = vector.broadcast %109 : vector<1x32xf32> to vector<8x32xf32>
    %111 = arith.addf %107, %110 : vector<8x32xf32>
    %cst_84 = arith.constant 0.000000e+00 : f32
    %112 = vector.broadcast %cst_84 : f32 to vector<8x32xf32>
    %113 = arith.maximumf %111, %112 : vector<8x32xf32>
    %c3_85 = arith.constant 3 : index
    %c0_86 = arith.constant 0 : index
    %c0_87 = arith.constant 0 : index
    %114 = vector.load %arg6[%c3_85, %c0_86, %c0_87] : memref<4x32x16xf32, #tpu.memory_space<vmem>>, vector<1x32x16xf32>
    %115 = vector.shape_cast %114 : vector<1x32x16xf32> to vector<32x16xf32>
    %cst_88 = arith.constant dense<0.000000e+00> : vector<8x16xf32>
    %116 = tpu.matmul %113, %115, %cst_88 {dimension_numbers = #tpu.dot_dimension_numbers<[1], [0], [0], [1], [0, 0, 1, 1], [], []>} : vector<8x32xf32>, vector<32x16xf32>, vector<8x16xf32> -> vector<8x16xf32>
    %c3_89 = arith.constant 3 : index
    %c0_90 = arith.constant 0 : index
    %c0_91 = arith.constant 0 : index
    %117 = vector.load %arg7[%c3_89, %c0_90, %c0_91] : memref<4x1x16xf32, #tpu.memory_space<vmem>>, vector<1x1x16xf32>
    %118 = vector.shape_cast %117 : vector<1x1x16xf32> to vector<1x16xf32>
    %119 = vector.broadcast %118 : vector<1x16xf32> to vector<8x16xf32>
    %120 = arith.addf %116, %119 : vector<8x16xf32>
    %121 = vector.extract_strided_slice %120 {offsets = [0, 0], sizes = [8, 8], strides = [1, 1]} : vector<8x16xf32> to vector<8x8xf32>
    %122 = vector.extract_strided_slice %120 {offsets = [0, 8], sizes = [8, 8], strides = [1, 1]} : vector<8x16xf32> to vector<8x8xf32>
    %123 = math.exp %121 : vector<8x8xf32>
    %124 = arith.mulf %94, %123 : vector<8x8xf32>
    %125 = arith.addf %124, %122 : vector<8x8xf32>
    %126 = arith.addf %95, %121 : vector<8x8xf32>
    %c0_92 = arith.constant 0 : index
    %c0_93 = arith.constant 0 : index
    %127 = vector.load %arg8[%c0_92, %c0_93] : memref<8x8xf32, #tpu.memory_space<vmem>>, vector<8x8xf32>
    tpu.vector_store %arg8[%c0_92, %c0_93], %125 {strides = array<i32>} : memref<8x8xf32, #tpu.memory_space<vmem>>, vector<8x8xf32>,
    %cst_94 = arith.constant dense<0.000000e+00> : vector<8xf32>
    %128 = vector.multi_reduction <add>, %126, %cst_94 [1] : vector<8x8xf32> to vector<8xf32>
    %129 = vector.shape_cast %128 : vector<8xf32> to vector<8x1xf32>
    %c0_95 = arith.constant 0 : index
    %c0_96 = arith.constant 0 : index
    %130 = vector.load %arg9[%c0_95, %c0_96] : memref<8x1xf32, #tpu.memory_space<vmem>>, vector<8x1xf32>
    tpu.vector_store %arg9[%c0_95, %c0_96], %129 {strides = array<i32>} : memref<8x1xf32, #tpu.memory_space<vmem>>, vector<8x1xf32>,
    return
  }
}

</mosaic_0001>

<llo_original>
// kernel: normalizing_flow_forward.1
$region0: #{normalizing_flow_forward.1}
  #allocation0 [shape = 'u32[]', space=smem, size = 0x4, offset = 0x4, fixed_abs, tag = 'smem constant byte address 0x4 - core index']
  #allocation1 [shape = 'u32[144,128]{1,0:T(1,128)}', space=vmem, size = 0x12000, scoped, tag = 'internal scratch']
  %s0 = inlined_call_operand.vmem [shape: f32[8,8], index: 0, kind: input, shape index: {}]
  %s1 = inlined_call_operand.vmem [shape: f32[8,8], index: 1, kind: input, shape index: {}]
  %s2 = inlined_call_operand.vmem [shape: f32[4,8,32], index: 2, kind: input, shape index: {}]
  %s3 = inlined_call_operand.vmem [shape: f32[4,1,32], index: 3, kind: input, shape index: {}]
  %s4 = inlined_call_operand.vmem [shape: f32[4,32,32], index: 4, kind: input, shape index: {}]
  %s5 = inlined_call_operand.vmem [shape: f32[4,1,32], index: 5, kind: input, shape index: {}]
  %s6 = inlined_call_operand.vmem [shape: f32[4,32,16], index: 6, kind: input, shape index: {}]
  %s7 = inlined_call_operand.vmem [shape: f32[4,1,16], index: 7, kind: input, shape index: {}]
  %s8 = inlined_call_operand.vmem [shape: f32[8,8], index: 8, kind: output, shape index: {0}]
  %s9 = inlined_call_operand.vmem [shape: f32[8,1], index: 9, kind: output, shape index: {1}]
  %10 = xla_tuple %s8, %s9
  %s11 = sld [smem:[#allocation0]]
  $region50: #{normalizing_flow_forward.1} parent=0
    _
  %s13 = ssub.s32 1, %s11
  %s14 = scalar_select 0, %s13, %s11
  // Predicated region
  $region2: #{normalizing_flow_forward.1} parent=0 // pred_check
    _
  $region3: #{normalizing_flow_forward.1} parent=0 // pred_check_branch
    %16 = sbr.rel (0) target = $region5
  $region4: #{normalizing_flow_forward.1} parent=0 // pred_region
    _
  $region5: #{normalizing_flow_forward.1} parent=0 // pred_fallthru
    _
  // Predicated region
  $region6: #{normalizing_flow_forward.1} parent=0 // pred_check
    _
  $region7: #{normalizing_flow_forward.1} parent=0 // pred_check_branch
    %18 = sbr.rel (0) target = $region9
  $region8: #{normalizing_flow_forward.1} parent=0 // pred_region
    _
  $region9: #{normalizing_flow_forward.1} parent=0 // pred_fallthru
    _
  // Predicated region
  $region10: #{normalizing_flow_forward.1} parent=0 // pred_check
    _
  $region11: #{normalizing_flow_forward.1} parent=0 // pred_check_branch
    %20 = sbr.rel (0) target = $region13
  $region12: #{normalizing_flow_forward.1} parent=0 // pred_region
    _
  $region13: #{normalizing_flow_forward.1} parent=0 // pred_fallthru
    _
  // Predicated region
  $region14: #{normalizing_flow_forward.1} parent=0 // pred_check
    _
  $region15: #{normalizing_flow_forward.1} parent=0 // pred_check_branch
    %22 = sbr.rel (0) target = $region17
  $region16: #{normalizing_flow_forward.1} parent=0 // pred_region
    _
  $region17: #{normalizing_flow_forward.1} parent=0 // pred_fallthru
    _
  // Predicated region
  $region18: #{normalizing_flow_forward.1} parent=0 // pred_check
    _
  $region19: #{normalizing_flow_forward.1} parent=0 // pred_check_branch
    %24 = sbr.rel (0) target = $region21
  $region20: #{normalizing_flow_forward.1} parent=0 // pred_region
    _
  $region21: #{normalizing_flow_forward.1} parent=0 // pred_fallthru
    _
  // Predicated region
  $region22: #{normalizing_flow_forward.1} parent=0 // pred_check
    _
  $region23: #{normalizing_flow_forward.1} parent=0 // pred_check_branch
    %26 = sbr.rel (0) target = $region25
  $region24: #{normalizing_flow_forward.1} parent=0 // pred_region
    _
  $region25: #{normalizing_flow_forward.1} parent=0 // pred_fallthru
    _
  // Predicated region
  $region26: #{normalizing_flow_forward.1} parent=0 // pred_check
    _
  $region27: #{normalizing_flow_forward.1} parent=0 // pred_check_branch
    %28 = sbr.rel (0) target = $region29
  $region28: #{normalizing_flow_forward.1} parent=0 // pred_region
    _
  $region29: #{normalizing_flow_forward.1} parent=0 // pred_fallthru
    _
  // Predicated region
  $region30: #{normalizing_flow_forward.1} parent=0 // pred_check
    _
  $region31: #{normalizing_flow_forward.1} parent=0 // pred_check_branch
    %30 = sbr.rel (0) target = $region33
  $region32: #{normalizing_flow_forward.1} parent=0 // pred_region
    _
  $region33: #{normalizing_flow_forward.1} parent=0 // pred_fallthru
    _
  %v31 = vld [vmem:[%s0] sm:$0xff]
  %v32 = vld [vmem:[%s1] sm:$0xff]
  %v33 = vld [vmem:[%s2] sm:$0xff]
  %v34 = vld [vmem:[%s3] sm:$0x1]
  %v36 = vlaneseq
  %v37 = vshrl.u32 %v36, 7
  %v38 = vsub.s32 0, %v37
  %v39 = vrot.slane %v34, %v38
  %vm41 = vcmask 64512
  %v43 = vsel %vm41, %v31, 0
  %45 = vmatprep.subr.mxu0 0.0
  %46 = vmatpush1.msra.mxu0 %v33
  %47 = vmatprep.subr.mxu0 0.0
  %48 = vmatpush1.msra.mxu0 0.0
  %49 = vmatprep.subr.mxu0 0.0
  %50 = vmatpush1.msra.mxu0 0.0
  %51 = vmatprep.subr.mxu0 0.0
  %52 = vmatpush1.msra.mxu0 0.0
  %53 = vmatprep.subr.mxu0 0.0
  %54 = vmatpush1.msra.mxu0 0.0
  %55 = vmatprep.subr.mxu0 0.0
  %56 = vmatpush1.msra.mxu0 0.0
  %57 = vmatprep.subr.mxu0 0.0
  %58 = vmatpush1.msra.mxu0 0.0
  %59 = vmatprep.subr.mxu0 0.0
  %60 = vmatpush1.msra.mxu0 0.0
  %61 = vmatprep.subr.mxu0 0.0
  %62 = vmatpush1.msra.mxu0 0.0
  %63 = vmatprep.subr.mxu0 0.0
  %64 = vmatpush1.msra.mxu0 0.0
  %65 = vmatprep.subr.mxu0 0.0
  %66 = vmatpush1.msra.mxu0 0.0
  %67 = vmatprep.subr.mxu0 0.0
  %68 = vmatpush1.msra.mxu0 0.0
  %69 = vmatprep.subr.mxu0 0.0
  %70 = vmatpush1.msra.mxu0 0.0
  %71 = vmatprep.subr.mxu0 0.0
  %72 = vmatpush1.msra.mxu0 0.0
  %73 = vmatprep.subr.mxu0 0.0
  %74 = vmatpush1.msra.mxu0 0.0
  %75 = vmatprep.subr.mxu0 0.0
  %76 = vmatpush1.msra.mxu0 0.0
  %77 = vmatprep.subr.mxu0 0.0
  %78 = vmatpush1.msra.mxu0 0.0
  %79 = vmatprep.subr.mxu0 0.0
  %80 = vmatpush1.msra.mxu0 0.0
  %81 = vmatprep.subr.mxu0 0.0
  %82 = vmatpush1.msra.mxu0 0.0
  %83 = vmatprep.subr.mxu0 0.0
  %84 = vmatpush1.msra.mxu0 0.0
  %85 = vmatprep.subr.mxu0 0.0
  %86 = vmatpush1.msra.mxu0 0.0
  %87 = vmatprep.subr.mxu0 0.0
  %88 = vmatpush1.msra.mxu0 0.0
  %89 = vmatprep.subr.mxu0 0.0
  %90 = vmatpush1.msra.mxu0 0.0
  %91 = vmatprep.subr.mxu0 0.0
  %92 = vmatpush1.msra.mxu0 0.0
  %93 = vmatprep.subr.mxu0 0.0
  %94 = vmatpush1.msra.mxu0 0.0
  %95 = vmatprep.subr.mxu0 0.0
  %96 = vmatpush1.msra.mxu0 0.0
  %97 = vmatprep.subr.mxu0 0.0
  %98 = vmatpush1.msra.mxu0 0.0
  %99 = vmatprep.subr.mxu0 0.0
  %100 = vmatpush1.msra.mxu0 0.0
  %101 = vmatprep.subr.mxu0 0.0
  %102 = vmatpush1.msra.mxu0 0.0
  %103 = vmatprep.subr.mxu0 0.0
  %104 = vmatpush1.msra.mxu0 0.0
  %105 = vmatprep.subr.mxu0 0.0
  %106 = vmatpush1.msra.mxu0 0.0
  %107 = vmatprep.subr.mxu0 0.0
  %108 = vmatpush1.msra.mxu0 0.0
  %109 = vmatprep.mubr.f32.mxu0 0.0
  %110 = vmatmul.mubr.f32.gmra.mrb[0].mxu0 %v43
  %v111 = vpop.f32.mrb[0].mxu0
  %v112 = vadd.f32 %v39, %v111
  %v113 = vpop.f32.mrb[0].mxu0
  %114 = vdwg.mxu0
  %v115 = vmax.f32 %v112, 0.0
  %v116 = vld [vmem:[%s4] sm:$0xff]
  %v117 = vld [vmem:[%s4 + $0x8] sm:$0xff]
  %v118 = vld [vmem:[%s4 + $0x10] sm:$0xff]
  %v119 = vld [vmem:[%s4 + $0x18] sm:$0xff]
  %v120 = vld [vmem:[%s5] sm:$0x1]
  %v122 = vlaneseq
  %v123 = vshrl.u32 %v122, 7
  %v124 = vsub.s32 0, %v123
  %v125 = vrot.slane %v120, %v124
  %vm127 = vcmask 261120
  %v129 = vsel %vm127, %v115, 0
  %131 = vmatprep.subr.mxu0 0.0
  %132 = vmatpush1.msra.mxu0 %v116
  %133 = vmatprep.subr.mxu0 0.0
  %134 = vmatpush1.msra.mxu0 %v117
  %135 = vmatprep.subr.mxu0 0.0
  %136 = vmatpush1.msra.mxu0 %v118
  %137 = vmatprep.subr.mxu0 0.0
  %138 = vmatpush1.msra.mxu0 %v119
  %139 = vmatprep.subr.mxu0 0.0
  %140 = vmatpush1.msra.mxu0 0.0
  %141 = vmatprep.subr.mxu0 0.0
  %142 = vmatpush1.msra.mxu0 0.0
  %143 = vmatprep.subr.mxu0 0.0
  %144 = vmatpush1.msra.mxu0 0.0
  %145 = vmatprep.subr.mxu0 0.0
  %146 = vmatpush1.msra.mxu0 0.0
  %147 = vmatprep.subr.mxu0 0.0
  %148 = vmatpush1.msra.mxu0 0.0
  %149 = vmatprep.subr.mxu0 0.0
  %150 = vmatpush1.msra.mxu0 0.0
  %151 = vmatprep.subr.mxu0 0.0
  %152 = vmatpush1.msra.mxu0 0.0
  %153 = vmatprep.subr.mxu0 0.0
  %154 = vmatpush1.msra.mxu0 0.0
  %155 = vmatprep.subr.mxu0 0.0
  %156 = vmatpush1.msra.mxu0 0.0
  %157 = vmatprep.subr.mxu0 0.0
  %158 = vmatpush1.msra.mxu0 0.0
  %159 = vmatprep.subr.mxu0 0.0
  %160 = vmatpush1.msra.mxu0 0.0
  %161 = vmatprep.subr.mxu0 0.0
  %162 = vmatpush1.msra.mxu0 0.0
  %163 = vmatprep.subr.mxu0 0.0
  %164 = vmatpush1.msra.mxu0 0.0
  %165 = vmatprep.subr.mxu0 0.0
  %166 = vmatpush1.msra.mxu0 0.0
  %167 = vmatprep.subr.mxu0 0.0
  %168 = vmatpush1.msra.mxu0 0.0
  %169 = vmatprep.subr.mxu0 0.0
  %170 = vmatpush1.msra.mxu0 0.0
  %171 = vmatprep.subr.mxu0 0.0
  %172 = vmatpush1.msra.mxu0 0.0
  %173 = vmatprep.subr.mxu0 0.0
  %174 = vmatpush1.msra.mxu0 0.0
  %175 = vmatprep.subr.mxu0 0.0
  %176 = vmatpush1.msra.mxu0 0.0
  %177 = vmatprep.subr.mxu0 0.0
  %178 = vmatpush1.msra.mxu0 0.0
  %179 = vmatprep.subr.mxu0 0.0
  %180 = vmatpush1.msra.mxu0 0.0
  %181 = vmatprep.subr.mxu0 0.0
  %182 = vmatpush1.msra.mxu0 0.0
  %183 = vmatprep.subr.mxu0 0.0
  %184 = vmatpush1.msra.mxu0 0.0
  %185 = vmatprep.subr.mxu0 0.0
  %186 = vmatpush1.msra.mxu0 0.0
  %187 = vmatprep.subr.mxu0 0.0
  %188 = vmatpush1.msra.mxu0 0.0
  %189 = vmatprep.subr.mxu0 0.0
  %190 = vmatpush1.msra.mxu0 0.0
  %191 = vmatprep.subr.mxu0 0.0
  %192 = vmatpush1.msra.mxu0 0.0
  %193 = vmatprep.subr.mxu0 0.0
  %194 = vmatpush1.msra.mxu0 0.0
  %195 = vmatprep.mubr.f32.mxu0 0.0
  %196 = vmatmul.mubr.f32.gmra.mrb[0].mxu0 %v129
  %v197 = vpop.f32.mrb[0].mxu0
  %v198 = vadd.f32 %v125, %v197
  %v199 = vpop.f32.mrb[0].mxu0
  %200 = vdwg.mxu0
  %v201 = vmax.f32 %v198, 0.0
  %v202 = vld [vmem:[%s6] sm:$0xff]
  %v203 = vld [vmem:[%s6 + $0x8] sm:$0xff]
  %v204 = vld [vmem:[%s6 + $0x10] sm:$0xff]
  %v205 = vld [vmem:[%s6 + $0x18] sm:$0xff]
  %v206 = vld [vmem:[%s7] sm:$0x1]
  %v208 = vlaneseq
  %v209 = vshrl.u32 %v208, 7
  %v210 = vsub.s32 0, %v209
  %v211 = vrot.slane %v206, %v210
  %v214 = vsel %vm127, %v201, 0
  %216 = vmatprep.subr.mxu0 0.0
  %217 = vmatpush1.msra.mxu0 %v202
  %218 = vmatprep.subr.mxu0 0.0
  %219 = vmatpush1.msra.mxu0 %v203
  %220 = vmatprep.subr.mxu0 0.0
  %221 = vmatpush1.msra.mxu0 %v204
  %222 = vmatprep.subr.mxu0 0.0
  %223 = vmatpush1.msra.mxu0 %v205
  %224 = vmatprep.subr.mxu0 0.0
  %225 = vmatpush1.msra.mxu0 0.0
  %226 = vmatprep.subr.mxu0 0.0
  %227 = vmatpush1.msra.mxu0 0.0
  %228 = vmatprep.subr.mxu0 0.0
  %229 = vmatpush1.msra.mxu0 0.0
  %230 = vmatprep.subr.mxu0 0.0
  %231 = vmatpush1.msra.mxu0 0.0
  %232 = vmatprep.subr.mxu0 0.0
  %233 = vmatpush1.msra.mxu0 0.0
  %234 = vmatprep.subr.mxu0 0.0
  %235 = vmatpush1.msra.mxu0 0.0
  %236 = vmatprep.subr.mxu0 0.0
  %237 = vmatpush1.msra.mxu0 0.0
  %238 = vmatprep.subr.mxu0 0.0
  %239 = vmatpush1.msra.mxu0 0.0
  %240 = vmatprep.subr.mxu0 0.0
  %241 = vmatpush1.msra.mxu0 0.0
  %242 = vmatprep.subr.mxu0 0.0
  %243 = vmatpush1.msra.mxu0 0.0
  %244 = vmatprep.subr.mxu0 0.0
  %245 = vmatpush1.msra.mxu0 0.0
  %246 = vmatprep.subr.mxu0 0.0
  %247 = vmatpush1.msra.mxu0 0.0
  %248 = vmatprep.subr.mxu0 0.0
  %249 = vmatpush1.msra.mxu0 0.0
  %250 = vmatprep.subr.mxu0 0.0
  %251 = vmatpush1.msra.mxu0 0.0
  %252 = vmatprep.subr.mxu0 0.0
  %253 = vmatpush1.msra.mxu0 0.0
  %254 = vmatprep.subr.mxu0 0.0
  %255 = vmatpush1.msra.mxu0 0.0
  %256 = vmatprep.subr.mxu0 0.0
  %257 = vmatpush1.msra.mxu0 0.0
  %258 = vmatprep.subr.mxu0 0.0
  %259 = vmatpush1.msra.mxu0 0.0
  %260 = vmatprep.subr.mxu0 0.0
  %261 = vmatpush1.msra.mxu0 0.0
  %262 = vmatprep.subr.mxu0 0.0
  %263 = vmatpush1.msra.mxu0 0.0
  %264 = vmatprep.subr.mxu0 0.0
  %265 = vmatpush1.msra.mxu0 0.0
  %266 = vmatprep.subr.mxu0 0.0
  %267 = vmatpush1.msra.mxu0 0.0
  %268 = vmatprep.subr.mxu0 0.0
  %269 = vmatpush1.msra.mxu0 0.0
  %270 = vmatprep.subr.mxu0 0.0
  %271 = vmatpush1.msra.mxu0 0.0
  %272 = vmatprep.subr.mxu0 0.0
  %273 = vmatpush1.msra.mxu0 0.0
  %274 = vmatprep.subr.mxu0 0.0
  %275 = vmatpush1.msra.mxu0 0.0
  %276 = vmatprep.subr.mxu0 0.0
  %277 = vmatpush1.msra.mxu0 0.0
  %278 = vmatprep.subr.mxu0 0.0
  %279 = vmatpush1.msra.mxu0 0.0
  %280 = vmatprep.mubr.f32.mxu0 0.0
  %281 = vmatmul.mubr.f32.gmra.mrb[0].mxu0 %v214
  %v282 = vpop.f32.mrb[0].mxu0
  %v283 = vadd.f32 %v211, %v282
  %v284 = vpop.f32.mrb[0].mxu0
  %285 = vdwg.mxu0
  %v286 = vmul.f32 %v283, 1.442695
  %v287 = vpow.pop %v286
  %v288 = vmul.f32 %v32, %v287
  %290 = vrot.lane.b32.xlu0 %v283, 120
  %v291 = vpop.permute.xlu0 %290
  %v293 = vadd.f32 %v288, %v291
  %v294 = vadd.f32 %v283, 0.0
  %s295 = scalar_lea.vmem %s2, 8
  %v296 = vld [vmem:[%s295] sm:$0xff]
  %s297 = scalar_lea.vmem %s3, 1
  %v298 = vld [vmem:[%s297] sm:$0x1]
  %v300 = vlaneseq
  %v301 = vshrl.u32 %v300, 7
  %v302 = vsub.s32 0, %v301
  %v303 = vrot.slane %v298, %v302
  %305 = vmatprep.subr.mxu0 0.0
  %306 = vmatpush1.msra.mxu0 %v296
  %307 = vmatprep.subr.mxu0 0.0
  %308 = vmatpush1.msra.mxu0 0.0
  %309 = vmatprep.subr.mxu0 0.0
  %310 = vmatpush1.msra.mxu0 0.0
  %311 = vmatprep.subr.mxu0 0.0
  %312 = vmatpush1.msra.mxu0 0.0
  %313 = vmatprep.subr.mxu0 0.0
  %314 = vmatpush1.msra.mxu0 0.0
  %315 = vmatprep.subr.mxu0 0.0
  %316 = vmatpush1.msra.mxu0 0.0
  %317 = vmatprep.subr.mxu0 0.0
  %318 = vmatpush1.msra.mxu0 0.0
  %319 = vmatprep.subr.mxu0 0.0
  %320 = vmatpush1.msra.mxu0 0.0
  %321 = vmatprep.subr.mxu0 0.0
  %322 = vmatpush1.msra.mxu0 0.0
  %323 = vmatprep.subr.mxu0 0.0
  %324 = vmatpush1.msra.mxu0 0.0
  %325 = vmatprep.subr.mxu0 0.0
  %326 = vmatpush1.msra.mxu0 0.0
  %327 = vmatprep.subr.mxu0 0.0
  %328 = vmatpush1.msra.mxu0 0.0
  %329 = vmatprep.subr.mxu0 0.0
  %330 = vmatpush1.msra.mxu0 0.0
  %331 = vmatprep.subr.mxu0 0.0
  %332 = vmatpush1.msra.mxu0 0.0
  %333 = vmatprep.subr.mxu0 0.0
  %334 = vmatpush1.msra.mxu0 0.0
  %335 = vmatprep.subr.mxu0 0.0
  %336 = vmatpush1.msra.mxu0 0.0
  %337 = vmatprep.subr.mxu0 0.0
  %338 = vmatpush1.msra.mxu0 0.0
  %339 = vmatprep.subr.mxu0 0.0
  %340 = vmatpush1.msra.mxu0 0.0
  %341 = vmatprep.subr.mxu0 0.0
  %342 = vmatpush1.msra.mxu0 0.0
  %343 = vmatprep.subr.mxu0 0.0
  %344 = vmatpush1.msra.mxu0 0.0
  %345 = vmatprep.subr.mxu0 0.0
  %346 = vmatpush1.msra.mxu0 0.0
  %347 = vmatprep.subr.mxu0 0.0
  %348 = vmatpush1.msra.mxu0 0.0
  %349 = vmatprep.subr.mxu0 0.0
  %350 = vmatpush1.msra.mxu0 0.0
  %351 = vmatprep.subr.mxu0 0.0
  %352 = vmatpush1.msra.mxu0 0.0
  %353 = vmatprep.subr.mxu0 0.0
  %354 = vmatpush1.msra.mxu0 0.0
  %355 = vmatprep.subr.mxu0 0.0
  %356 = vmatpush1.msra.mxu0 0.0
  %357 = vmatprep.subr.mxu0 0.0
  %358 = vmatpush1.msra.mxu0 0.0
  %359 = vmatprep.subr.mxu0 0.0
  %360 = vmatpush1.msra.mxu0 0.0
  %361 = vmatprep.subr.mxu0 0.0
  %362 = vmatpush1.msra.mxu0 0.0
  %363 = vmatprep.subr.mxu0 0.0
  %364 = vmatpush1.msra.mxu0 0.0
  %365 = vmatprep.subr.mxu0 0.0
  %366 = vmatpush1.msra.mxu0 0.0
  %367 = vmatprep.subr.mxu0 0.0
  %368 = vmatpush1.msra.mxu0 0.0
  %369 = vmatprep.mubr.f32.mxu0 0.0
  %370 = vmatmul.mubr.f32.gmra.mrb[0].mxu0 %v43
  %v371 = vpop.f32.mrb[0].mxu0
  %v372 = vadd.f32 %v303, %v371
  %v373 = vpop.f32.mrb[0].mxu0
  %374 = vdwg.mxu0
  %v375 = vmax.f32 %v372, 0.0
  %s376 = scalar_lea.vmem %s4, 32
  %v377 = vld [vmem:[%s376] sm:$0xff]
  %v378 = vld [vmem:[%s376 + $0x8] sm:$0xff]
  %v379 = vld [vmem:[%s376 + $0x10] sm:$0xff]
  %v380 = vld [vmem:[%s376 + $0x18] sm:$0xff]
  %s381 = scalar_lea.vmem %s5, 1
  %v382 = vld [vmem:[%s381] sm:$0x1]
  %v384 = vlaneseq
  %v385 = vshrl.u32 %v384, 7
  %v386 = vsub.s32 0, %v385
  %v387 = vrot.slane %v382, %v386
  %v390 = vsel %vm127, %v375, 0
  %392 = vmatprep.subr.mxu0 0.0
  %393 = vmatpush1.msra.mxu0 %v377
  %394 = vmatprep.subr.mxu0 0.0
  %395 = vmatpush1.msra.mxu0 %v378
  %396 = vmatprep.subr.mxu0 0.0
  %397 = vmatpush1.msra.mxu0 %v379
  %398 = vmatprep.subr.mxu0 0.0
  %399 = vmatpush1.msra.mxu0 %v380
  %400 = vmatprep.subr.mxu0 0.0
  %401 = vmatpush1.msra.mxu0 0.0
  %402 = vmatprep.subr.mxu0 0.0
  %403 = vmatpush1.msra.mxu0 0.0
  %404 = vmatprep.subr.mxu0 0.0
  %405 = vmatpush1.msra.mxu0 0.0
  %406 = vmatprep.subr.mxu0 0.0
  %407 = vmatpush1.msra.mxu0 0.0
  %408 = vmatprep.subr.mxu0 0.0
  %409 = vmatpush1.msra.mxu0 0.0
  %410 = vmatprep.subr.mxu0 0.0
  %411 = vmatpush1.msra.mxu0 0.0
  %412 = vmatprep.subr.mxu0 0.0
  %413 = vmatpush1.msra.mxu0 0.0
  %414 = vmatprep.subr.mxu0 0.0
  %415 = vmatpush1.msra.mxu0 0.0
  %416 = vmatprep.subr.mxu0 0.0
  %417 = vmatpush1.msra.mxu0 0.0
  %418 = vmatprep.subr.mxu0 0.0
  %419 = vmatpush1.msra.mxu0 0.0
  %420 = vmatprep.subr.mxu0 0.0
  %421 = vmatpush1.msra.mxu0 0.0
  %422 = vmatprep.subr.mxu0 0.0
  %423 = vmatpush1.msra.mxu0 0.0
  %424 = vmatprep.subr.mxu0 0.0
  %425 = vmatpush1.msra.mxu0 0.0
  %426 = vmatprep.subr.mxu0 0.0
  %427 = vmatpush1.msra.mxu0 0.0
  %428 = vmatprep.subr.mxu0 0.0
  %429 = vmatpush1.msra.mxu0 0.0
  %430 = vmatprep.subr.mxu0 0.0
  %431 = vmatpush1.msra.mxu0 0.0
  %432 = vmatprep.subr.mxu0 0.0
  %433 = vmatpush1.msra.mxu0 0.0
  %434 = vmatprep.subr.mxu0 0.0
  %435 = vmatpush1.msra.mxu0 0.0
  %436 = vmatprep.subr.mxu0 0.0
  %437 = vmatpush1.msra.mxu0 0.0
  %438 = vmatprep.subr.mxu0 0.0
  %439 = vmatpush1.msra.mxu0 0.0
  %440 = vmatprep.subr.mxu0 0.0
  %441 = vmatpush1.msra.mxu0 0.0
  %442 = vmatprep.subr.mxu0 0.0
  %443 = vmatpush1.msra.mxu0 0.0
  %444 = vmatprep.subr.mxu0 0.0
  %445 = vmatpush1.msra.mxu0 0.0
  %446 = vmatprep.subr.mxu0 0.0
  %447 = vmatpush1.msra.mxu0 0.0
  %448 = vmatprep.subr.mxu0 0.0
  %449 = vmatpush1.msra.mxu0 0.0
  %450 = vmatprep.subr.mxu0 0.0
  %451 = vmatpush1.msra.mxu0 0.0
  %452 = vmatprep.subr.mxu0 0.0
  %453 = vmatpush1.msra.mxu0 0.0
  %454 = vmatprep.subr.mxu0 0.0
  %455 = vmatpush1.msra.mxu0 0.0
  %456 = vmatprep.mubr.f32.mxu0 0.0
  %457 = vmatmul.mubr.f32.gmra.mrb[0].mxu0 %v390
  %v458 = vpop.f32.mrb[0].mxu0
  %v459 = vadd.f32 %v387, %v458
  %v460 = vpop.f32.mrb[0].mxu0
  %461 = vdwg.mxu0
  %v462 = vmax.f32 %v459, 0.0
  %s463 = scalar_lea.vmem %s6, 32
  %v464 = vld [vmem:[%s463] sm:$0xff]
  %v465 = vld [vmem:[%s463 + $0x8] sm:$0xff]
  %v466 = vld [vmem:[%s463 + $0x10] sm:$0xff]
  %v467 = vld [vmem:[%s463 + $0x18] sm:$0xff]
  %s468 = scalar_lea.vmem %s7, 1
  %v469 = vld [vmem:[%s468] sm:$0x1]
  %v471 = vlaneseq
  %v472 = vshrl.u32 %v471, 7
  %v473 = vsub.s32 0, %v472
  %v474 = vrot.slane %v469, %v473
  %v477 = vsel %vm127, %v462, 0
  %479 = vmatprep.subr.mxu0 0.0
  %480 = vmatpush1.msra.mxu0 %v464
  %481 = vmatprep.subr.mxu0 0.0
  %482 = vmatpush1.msra.mxu0 %v465
  %483 = vmatprep.subr.mxu0 0.0
  %484 = vmatpush1.msra.mxu0 %v466
  %485 = vmatprep.subr.mxu0 0.0
  %486 = vmatpush1.msra.mxu0 %v467
  %487 = vmatprep.subr.mxu0 0.0
  %488 = vmatpush1.msra.mxu0 0.0
  %489 = vmatprep.subr.mxu0 0.0
  %490 = vmatpush1.msra.mxu0 0.0
  %491 = vmatprep.subr.mxu0 0.0
  %492 = vmatpush1.msra.mxu0 0.0
  %493 = vmatprep.subr.mxu0 0.0
  %494 = vmatpush1.msra.mxu0 0.0
  %495 = vmatprep.subr.mxu0 0.0
  %496 = vmatpush1.msra.mxu0 0.0
  %497 = vmatprep.subr.mxu0 0.0
  %498 = vmatpush1.msra.mxu0 0.0
  %499 = vmatprep.subr.mxu0 0.0
  %500 = vmatpush1.msra.mxu0 0.0
  %501 = vmatprep.subr.mxu0 0.0
  %502 = vmatpush1.msra.mxu0 0.0
  %503 = vmatprep.subr.mxu0 0.0
  %504 = vmatpush1.msra.mxu0 0.0
  %505 = vmatprep.subr.mxu0 0.0
  %506 = vmatpush1.msra.mxu0 0.0
  %507 = vmatprep.subr.mxu0 0.0
  %508 = vmatpush1.msra.mxu0 0.0
  %509 = vmatprep.subr.mxu0 0.0
  %510 = vmatpush1.msra.mxu0 0.0
  %511 = vmatprep.subr.mxu0 0.0
  %512 = vmatpush1.msra.mxu0 0.0
  %513 = vmatprep.subr.mxu0 0.0
  %514 = vmatpush1.msra.mxu0 0.0
  %515 = vmatprep.subr.mxu0 0.0
  %516 = vmatpush1.msra.mxu0 0.0
  %517 = vmatprep.subr.mxu0 0.0
  %518 = vmatpush1.msra.mxu0 0.0
  %519 = vmatprep.subr.mxu0 0.0
  %520 = vmatpush1.msra.mxu0 0.0
  %521 = vmatprep.subr.mxu0 0.0
  %522 = vmatpush1.msra.mxu0 0.0
  %523 = vmatprep.subr.mxu0 0.0
  %524 = vmatpush1.msra.mxu0 0.0
  %525 = vmatprep.subr.mxu0 0.0
  %526 = vmatpush1.msra.mxu0 0.0
  %527 = vmatprep.subr.mxu0 0.0
  %528 = vmatpush1.msra.mxu0 0.0
  %529 = vmatprep.subr.mxu0 0.0
  %530 = vmatpush1.msra.mxu0 0.0
  %531 = vmatprep.subr.mxu0 0.0
  %532 = vmatpush1.msra.mxu0 0.0
  %533 = vmatprep.subr.mxu0 0.0
  %534 = vmatpush1.msra.mxu0 0.0
  %535 = vmatprep.subr.mxu0 0.0
  %536 = vmatpush1.msra.mxu0 0.0
  %537 = vmatprep.subr.mxu0 0.0
  %538 = vmatpush1.msra.mxu0 0.0
  %539 = vmatprep.subr.mxu0 0.0
  %540 = vmatpush1.msra.mxu0 0.0
  %541 = vmatprep.subr.mxu0 0.0
  %542 = vmatpush1.msra.mxu0 0.0
  %543 = vmatprep.mubr.f32.mxu0 0.0
  %544 = vmatmul.mubr.f32.gmra.mrb[0].mxu0 %v477
  %v545 = vpop.f32.mrb[0].mxu0
  %v546 = vadd.f32 %v474, %v545
  %v547 = vpop.f32.mrb[0].mxu0
  %548 = vdwg.mxu0
  %v549 = vmul.f32 %v546, 1.442695
  %v550 = vpow.pop %v549
  %v551 = vmul.f32 %v293, %v550
  %553 = vrot.lane.b32.xlu0 %v546, 120
  %v554 = vpop.permute.xlu0 %553
  %v556 = vadd.f32 %v551, %v554
  %v557 = vadd.f32 %v294, %v546
  %s558 = scalar_lea.vmem %s2, 16
  %v559 = vld [vmem:[%s558] sm:$0xff]
  %s560 = scalar_lea.vmem %s3, 2
  %v561 = vld [vmem:[%s560] sm:$0x1]
  %v563 = vlaneseq
  %v564 = vshrl.u32 %v563, 7
  %v565 = vsub.s32 0, %v564
  %v566 = vrot.slane %v561, %v565
  %568 = vmatprep.subr.mxu0 0.0
  %569 = vmatpush1.msra.mxu0 %v559
  %570 = vmatprep.subr.mxu0 0.0
  %571 = vmatpush1.msra.mxu0 0.0
  %572 = vmatprep.subr.mxu0 0.0
  %573 = vmatpush1.msra.mxu0 0.0
  %574 = vmatprep.subr.mxu0 0.0
  %575 = vmatpush1.msra.mxu0 0.0
  %576 = vmatprep.subr.mxu0 0.0
  %577 = vmatpush1.msra.mxu0 0.0
  %578 = vmatprep.subr.mxu0 0.0
  %579 = vmatpush1.msra.mxu0 0.0
  %580 = vmatprep.subr.mxu0 0.0
  %581 = vmatpush1.msra.mxu0 0.0
  %582 = vmatprep.subr.mxu0 0.0
  %583 = vmatpush1.msra.mxu0 0.0
  %584 = vmatprep.subr.mxu0 0.0
  %585 = vmatpush1.msra.mxu0 0.0
  %586 = vmatprep.subr.mxu0 0.0
  %587 = vmatpush1.msra.mxu0 0.0
  %588 = vmatprep.subr.mxu0 0.0
  %589 = vmatpush1.msra.mxu0 0.0
  %590 = vmatprep.subr.mxu0 0.0
  %591 = vmatpush1.msra.mxu0 0.0
  %592 = vmatprep.subr.mxu0 0.0
  %593 = vmatpush1.msra.mxu0 0.0
  %594 = vmatprep.subr.mxu0 0.0
  %595 = vmatpush1.msra.mxu0 0.0
  %596 = vmatprep.subr.mxu0 0.0
  %597 = vmatpush1.msra.mxu0 0.0
  %598 = vmatprep.subr.mxu0 0.0
  %599 = vmatpush1.msra.mxu0 0.0
  %600 = vmatprep.subr.mxu0 0.0
  %601 = vmatpush1.msra.mxu0 0.0
  %602 = vmatprep.subr.mxu0 0.0
  %603 = vmatpush1.msra.mxu0 0.0
  %604 = vmatprep.subr.mxu0 0.0
  %605 = vmatpush1.msra.mxu0 0.0
  %606 = vmatprep.subr.mxu0 0.0
  %607 = vmatpush1.msra.mxu0 0.0
  %608 = vmatprep.subr.mxu0 0.0
  %609 = vmatpush1.msra.mxu0 0.0
  %610 = vmatprep.subr.mxu0 0.0
  %611 = vmatpush1.msra.mxu0 0.0
  %612 = vmatprep.subr.mxu0 0.0
  %613 = vmatpush1.msra.mxu0 0.0
  %614 = vmatprep.subr.mxu0 0.0
  %615 = vmatpush1.msra.mxu0 0.0
  %616 = vmatprep.subr.mxu0 0.0
  %617 = vmatpush1.msra.mxu0 0.0
  %618 = vmatprep.subr.mxu0 0.0
  %619 = vmatpush1.msra.mxu0 0.0
  %620 = vmatprep.subr.mxu0 0.0
  %621 = vmatpush1.msra.mxu0 0.0
  %622 = vmatprep.subr.mxu0 0.0
  %623 = vmatpush1.msra.mxu0 0.0
  %624 = vmatprep.subr.mxu0 0.0
  %625 = vmatpush1.msra.mxu0 0.0
  %626 = vmatprep.subr.mxu0 0.0
  %627 = vmatpush1.msra.mxu0 0.0
  %628 = vmatprep.subr.mxu0 0.0
  %629 = vmatpush1.msra.mxu0 0.0
  %630 = vmatprep.subr.mxu0 0.0
  %631 = vmatpush1.msra.mxu0 0.0
  %632 = vmatprep.mubr.f32.mxu0 0.0
  %633 = vmatmul.mubr.f32.gmra.mrb[0].mxu0 %v43
  %v634 = vpop.f32.mrb[0].mxu0
  %v635 = vadd.f32 %v566, %v634
  %v636 = vpop.f32.mrb[0].mxu0
  %637 = vdwg.mxu0
  %v638 = vmax.f32 %v635, 0.0
  %s639 = scalar_lea.vmem %s4, 64
  %v640 = vld [vmem:[%s639] sm:$0xff]
  %v641 = vld [vmem:[%s639 + $0x8] sm:$0xff]
  %v642 = vld [vmem:[%s639 + $0x10] sm:$0xff]
  %v643 = vld [vmem:[%s639 + $0x18] sm:$0xff]
  %s644 = scalar_lea.vmem %s5, 2
  %v645 = vld [vmem:[%s644] sm:$0x1]
  %v647 = vlaneseq
  %v648 = vshrl.u32 %v647, 7
  %v649 = vsub.s32 0, %v648
  %v650 = vrot.slane %v645, %v649
  %v653 = vsel %vm127, %v638, 0
  %655 = vmatprep.subr.mxu0 0.0
  %656 = vmatpush1.msra.mxu0 %v640
  %657 = vmatprep.subr.mxu0 0.0
  %658 = vmatpush1.msra.mxu0 %v641
  %659 = vmatprep.subr.mxu0 0.0
  %660 = vmatpush1.msra.mxu0 %v642
  %661 = vmatprep.subr.mxu0 0.0
  %662 = vmatpush1.msra.mxu0 %v643
  %663 = vmatprep.subr.mxu0 0.0
  %664 = vmatpush1.msra.mxu0 0.0
  %665 = vmatprep.subr.mxu0 0.0
  %666 = vmatpush1.msra.mxu0 0.0
  %667 = vmatprep.subr.mxu0 0.0
  %668 = vmatpush1.msra.mxu0 0.0
  %669 = vmatprep.subr.mxu0 0.0
  %670 = vmatpush1.msra.mxu0 0.0
  %671 = vmatprep.subr.mxu0 0.0
  %672 = vmatpush1.msra.mxu0 0.0
  %673 = vmatprep.subr.mxu0 0.0
  %674 = vmatpush1.msra.mxu0 0.0
  %675 = vmatprep.subr.mxu0 0.0
  %676 = vmatpush1.msra.mxu0 0.0
  %677 = vmatprep.subr.mxu0 0.0
  %678 = vmatpush1.msra.mxu0 0.0
  %679 = vmatprep.subr.mxu0 0.0
  %680 = vmatpush1.msra.mxu0 0.0
  %681 = vmatprep.subr.mxu0 0.0
  %682 = vmatpush1.msra.mxu0 0.0
  %683 = vmatprep.subr.mxu0 0.0
  %684 = vmatpush1.msra.mxu0 0.0
  %685 = vmatprep.subr.mxu0 0.0
  %686 = vmatpush1.msra.mxu0 0.0
  %687 = vmatprep.subr.mxu0 0.0
  %688 = vmatpush1.msra.mxu0 0.0
  %689 = vmatprep.subr.mxu0 0.0
  %690 = vmatpush1.msra.mxu0 0.0
  %691 = vmatprep.subr.mxu0 0.0
  %692 = vmatpush1.msra.mxu0 0.0
  %693 = vmatprep.subr.mxu0 0.0
  %694 = vmatpush1.msra.mxu0 0.0
  %695 = vmatprep.subr.mxu0 0.0
  %696 = vmatpush1.msra.mxu0 0.0
  %697 = vmatprep.subr.mxu0 0.0
  %698 = vmatpush1.msra.mxu0 0.0
  %699 = vmatprep.subr.mxu0 0.0
  %700 = vmatpush1.msra.mxu0 0.0
  %701 = vmatprep.subr.mxu0 0.0
  %702 = vmatpush1.msra.mxu0 0.0
  %703 = vmatprep.subr.mxu0 0.0
  %704 = vmatpush1.msra.mxu0 0.0
  %705 = vmatprep.subr.mxu0 0.0
  %706 = vmatpush1.msra.mxu0 0.0
  %707 = vmatprep.subr.mxu0 0.0
  %708 = vmatpush1.msra.mxu0 0.0
  %709 = vmatprep.subr.mxu0 0.0
  %710 = vmatpush1.msra.mxu0 0.0
  %711 = vmatprep.subr.mxu0 0.0
  %712 = vmatpush1.msra.mxu0 0.0
  %713 = vmatprep.subr.mxu0 0.0
  %714 = vmatpush1.msra.mxu0 0.0
  %715 = vmatprep.subr.mxu0 0.0
  %716 = vmatpush1.msra.mxu0 0.0
  %717 = vmatprep.subr.mxu0 0.0
  %718 = vmatpush1.msra.mxu0 0.0
  %719 = vmatprep.mubr.f32.mxu0 0.0
  %720 = vmatmul.mubr.f32.gmra.mrb[0].mxu0 %v653
  %v721 = vpop.f32.mrb[0].mxu0
  %v722 = vadd.f32 %v650, %v721
  %v723 = vpop.f32.mrb[0].mxu0
  %724 = vdwg.mxu0
  %v725 = vmax.f32 %v722, 0.0
  %s726 = scalar_lea.vmem %s6, 64
  %v727 = vld [vmem:[%s726] sm:$0xff]
  %v728 = vld [vmem:[%s726 + $0x8] sm:$0xff]
  %v729 = vld [vmem:[%s726 + $0x10] sm:$0xff]
  %v730 = vld [vmem:[%s726 + $0x18] sm:$0xff]
  %s731 = scalar_lea.vmem %s7, 2
  %v732 = vld [vmem:[%s731] sm:$0x1]
  %v734 = vlaneseq
  %v735 = vshrl.u32 %v734, 7
  %v736 = vsub.s32 0, %v735
  %v737 = vrot.slane %v732, %v736
  %v740 = vsel %vm127, %v725, 0
  %742 = vmatprep.subr.mxu0 0.0
  %743 = vmatpush1.msra.mxu0 %v727
  %744 = vmatprep.subr.mxu0 0.0
  %745 = vmatpush1.msra.mxu0 %v728
  %746 = vmatprep.subr.mxu0 0.0
  %747 = vmatpush1.msra.mxu0 %v729
  %748 = vmatprep.subr.mxu0 0.0
  %749 = vmatpush1.msra.mxu0 %v730
  %750 = vmatprep.subr.mxu0 0.0
  %751 = vmatpush1.msra.mxu0 0.0
  %752 = vmatprep.subr.mxu0 0.0
  %753 = vmatpush1.msra.mxu0 0.0
  %754 = vmatprep.subr.mxu0 0.0
  %755 = vmatpush1.msra.mxu0 0.0
  %756 = vmatprep.subr.mxu0 0.0
  %757 = vmatpush1.msra.mxu0 0.0
  %758 = vmatprep.subr.mxu0 0.0
  %759 = vmatpush1.msra.mxu0 0.0
  %760 = vmatprep.subr.mxu0 0.0
  %761 = vmatpush1.msra.mxu0 0.0
  %762 = vmatprep.subr.mxu0 0.0
  %763 = vmatpush1.msra.mxu0 0.0
  %764 = vmatprep.subr.mxu0 0.0
  %765 = vmatpush1.msra.mxu0 0.0
  %766 = vmatprep.subr.mxu0 0.0
  %767 = vmatpush1.msra.mxu0 0.0
  %768 = vmatprep.subr.mxu0 0.0
  %769 = vmatpush1.msra.mxu0 0.0
  %770 = vmatprep.subr.mxu0 0.0
  %771 = vmatpush1.msra.mxu0 0.0
  %772 = vmatprep.subr.mxu0 0.0
  %773 = vmatpush1.msra.mxu0 0.0
  %774 = vmatprep.subr.mxu0 0.0
  %775 = vmatpush1.msra.mxu0 0.0
  %776 = vmatprep.subr.mxu0 0.0
  %777 = vmatpush1.msra.mxu0 0.0
  %778 = vmatprep.subr.mxu0 0.0
  %779 = vmatpush1.msra.mxu0 0.0
  %780 = vmatprep.subr.mxu0 0.0
  %781 = vmatpush1.msra.mxu0 0.0
  %782 = vmatprep.subr.mxu0 0.0
  %783 = vmatpush1.msra.mxu0 0.0
  %784 = vmatprep.subr.mxu0 0.0
  %785 = vmatpush1.msra.mxu0 0.0
  %786 = vmatprep.subr.mxu0 0.0
  %787 = vmatpush1.msra.mxu0 0.0
  %788 = vmatprep.subr.mxu0 0.0
  %789 = vmatpush1.msra.mxu0 0.0
  %790 = vmatprep.subr.mxu0 0.0
  %791 = vmatpush1.msra.mxu0 0.0
  %792 = vmatprep.subr.mxu0 0.0
  %793 = vmatpush1.msra.mxu0 0.0
  %794 = vmatprep.subr.mxu0 0.0
  %795 = vmatpush1.msra.mxu0 0.0
  %796 = vmatprep.subr.mxu0 0.0
  %797 = vmatpush1.msra.mxu0 0.0
  %798 = vmatprep.subr.mxu0 0.0
  %799 = vmatpush1.msra.mxu0 0.0
  %800 = vmatprep.subr.mxu0 0.0
  %801 = vmatpush1.msra.mxu0 0.0
  %802 = vmatprep.subr.mxu0 0.0
  %803 = vmatpush1.msra.mxu0 0.0
  %804 = vmatprep.subr.mxu0 0.0
  %805 = vmatpush1.msra.mxu0 0.0
  %806 = vmatprep.mubr.f32.mxu0 0.0
  %807 = vmatmul.mubr.f32.gmra.mrb[0].mxu0 %v740
  %v808 = vpop.f32.mrb[0].mxu0
  %v809 = vadd.f32 %v737, %v808
  %v810 = vpop.f32.mrb[0].mxu0
  %811 = vdwg.mxu0
  %v812 = vmul.f32 %v809, 1.442695
  %v813 = vpow.pop %v812
  %v814 = vmul.f32 %v556, %v813
  %816 = vrot.lane.b32.xlu0 %v809, 120
  %v817 = vpop.permute.xlu0 %816
  %v819 = vadd.f32 %v814, %v817
  %v820 = vadd.f32 %v557, %v809
  %s821 = scalar_lea.vmem %s2, 24
  %v822 = vld [vmem:[%s821] sm:$0xff]
  %s823 = scalar_lea.vmem %s3, 3
  %v824 = vld [vmem:[%s823] sm:$0x1]
  %v826 = vlaneseq
  %v827 = vshrl.u32 %v826, 7
  %v828 = vsub.s32 0, %v827
  %v829 = vrot.slane %v824, %v828
  %831 = vmatprep.subr.mxu0 0.0
  %832 = vmatpush1.msra.mxu0 %v822
  %833 = vmatprep.subr.mxu0 0.0
  %834 = vmatpush1.msra.mxu0 0.0
  %835 = vmatprep.subr.mxu0 0.0
  %836 = vmatpush1.msra.mxu0 0.0
  %837 = vmatprep.subr.mxu0 0.0
  %838 = vmatpush1.msra.mxu0 0.0
  %839 = vmatprep.subr.mxu0 0.0
  %840 = vmatpush1.msra.mxu0 0.0
  %841 = vmatprep.subr.mxu0 0.0
  %842 = vmatpush1.msra.mxu0 0.0
  %843 = vmatprep.subr.mxu0 0.0
  %844 = vmatpush1.msra.mxu0 0.0
  %845 = vmatprep.subr.mxu0 0.0
  %846 = vmatpush1.msra.mxu0 0.0
  %847 = vmatprep.subr.mxu0 0.0
  %848 = vmatpush1.msra.mxu0 0.0
  %849 = vmatprep.subr.mxu0 0.0
  %850 = vmatpush1.msra.mxu0 0.0
  %851 = vmatprep.subr.mxu0 0.0
  %852 = vmatpush1.msra.mxu0 0.0
  %853 = vmatprep.subr.mxu0 0.0
  %854 = vmatpush1.msra.mxu0 0.0
  %855 = vmatprep.subr.mxu0 0.0
  %856 = vmatpush1.msra.mxu0 0.0
  %857 = vmatprep.subr.mxu0 0.0
  %858 = vmatpush1.msra.mxu0 0.0
  %859 = vmatprep.subr.mxu0 0.0
  %860 = vmatpush1.msra.mxu0 0.0
  %861 = vmatprep.subr.mxu0 0.0
  %862 = vmatpush1.msra.mxu0 0.0
  %863 = vmatprep.subr.mxu0 0.0
  %864 = vmatpush1.msra.mxu0 0.0
  %865 = vmatprep.subr.mxu0 0.0
  %866 = vmatpush1.msra.mxu0 0.0
  %867 = vmatprep.subr.mxu0 0.0
  %868 = vmatpush1.msra.mxu0 0.0
  %869 = vmatprep.subr.mxu0 0.0
  %870 = vmatpush1.msra.mxu0 0.0
  %871 = vmatprep.subr.mxu0 0.0
  %872 = vmatpush1.msra.mxu0 0.0
  %873 = vmatprep.subr.mxu0 0.0
  %874 = vmatpush1.msra.mxu0 0.0
  %875 = vmatprep.subr.mxu0 0.0
  %876 = vmatpush1.msra.mxu0 0.0
  %877 = vmatprep.subr.mxu0 0.0
  %878 = vmatpush1.msra.mxu0 0.0
  %879 = vmatprep.subr.mxu0 0.0
  %880 = vmatpush1.msra.mxu0 0.0
  %881 = vmatprep.subr.mxu0 0.0
  %882 = vmatpush1.msra.mxu0 0.0
  %883 = vmatprep.subr.mxu0 0.0
  %884 = vmatpush1.msra.mxu0 0.0
  %885 = vmatprep.subr.mxu0 0.0
  %886 = vmatpush1.msra.mxu0 0.0
  %887 = vmatprep.subr.mxu0 0.0
  %888 = vmatpush1.msra.mxu0 0.0
  %889 = vmatprep.subr.mxu0 0.0
  %890 = vmatpush1.msra.mxu0 0.0
  %891 = vmatprep.subr.mxu0 0.0
  %892 = vmatpush1.msra.mxu0 0.0
  %893 = vmatprep.subr.mxu0 0.0
  %894 = vmatpush1.msra.mxu0 0.0
  %895 = vmatprep.mubr.f32.mxu0 0.0
  %896 = vmatmul.mubr.f32.gmra.mrb[0].mxu0 %v43
  %v897 = vpop.f32.mrb[0].mxu0
  %v898 = vadd.f32 %v829, %v897
  %v899 = vpop.f32.mrb[0].mxu0
  %900 = vdwg.mxu0
  %v901 = vmax.f32 %v898, 0.0
  %s902 = scalar_lea.vmem %s4, 96
  %v903 = vld [vmem:[%s902] sm:$0xff]
  %v904 = vld [vmem:[%s902 + $0x8] sm:$0xff]
  %v905 = vld [vmem:[%s902 + $0x10] sm:$0xff]
  %v906 = vld [vmem:[%s902 + $0x18] sm:$0xff]
  %s907 = scalar_lea.vmem %s5, 3
  %v908 = vld [vmem:[%s907] sm:$0x1]
  %v910 = vlaneseq
  %v911 = vshrl.u32 %v910, 7
  %v912 = vsub.s32 0, %v911
  %v913 = vrot.slane %v908, %v912
  %v916 = vsel %vm127, %v901, 0
  %918 = vmatprep.subr.mxu0 0.0
  %919 = vmatpush1.msra.mxu0 %v903
  %920 = vmatprep.subr.mxu0 0.0
  %921 = vmatpush1.msra.mxu0 %v904
  %922 = vmatprep.subr.mxu0 0.0
  %923 = vmatpush1.msra.mxu0 %v905
  %924 = vmatprep.subr.mxu0 0.0
  %925 = vmatpush1.msra.mxu0 %v906
  %926 = vmatprep.subr.mxu0 0.0
  %927 = vmatpush1.msra.mxu0 0.0
  %928 = vmatprep.subr.mxu0 0.0
  %929 = vmatpush1.msra.mxu0 0.0
  %930 = vmatprep.subr.mxu0 0.0
  %931 = vmatpush1.msra.mxu0 0.0
  %932 = vmatprep.subr.mxu0 0.0
  %933 = vmatpush1.msra.mxu0 0.0
  %934 = vmatprep.subr.mxu0 0.0
  %935 = vmatpush1.msra.mxu0 0.0
  %936 = vmatprep.subr.mxu0 0.0
  %937 = vmatpush1.msra.mxu0 0.0
  %938 = vmatprep.subr.mxu0 0.0
  %939 = vmatpush1.msra.mxu0 0.0
  %940 = vmatprep.subr.mxu0 0.0
  %941 = vmatpush1.msra.mxu0 0.0
  %942 = vmatprep.subr.mxu0 0.0
  %943 = vmatpush1.msra.mxu0 0.0
  %944 = vmatprep.subr.mxu0 0.0
  %945 = vmatpush1.msra.mxu0 0.0
  %946 = vmatprep.subr.mxu0 0.0
  %947 = vmatpush1.msra.mxu0 0.0
  %948 = vmatprep.subr.mxu0 0.0
  %949 = vmatpush1.msra.mxu0 0.0
  %950 = vmatprep.subr.mxu0 0.0
  %951 = vmatpush1.msra.mxu0 0.0
  %952 = vmatprep.subr.mxu0 0.0
  %953 = vmatpush1.msra.mxu0 0.0
  %954 = vmatprep.subr.mxu0 0.0
  %955 = vmatpush1.msra.mxu0 0.0
  %956 = vmatprep.subr.mxu0 0.0
  %957 = vmatpush1.msra.mxu0 0.0
  %958 = vmatprep.subr.mxu0 0.0
  %959 = vmatpush1.msra.mxu0 0.0
  %960 = vmatprep.subr.mxu0 0.0
  %961 = vmatpush1.msra.mxu0 0.0
  %962 = vmatprep.subr.mxu0 0.0
  %963 = vmatpush1.msra.mxu0 0.0
  %964 = vmatprep.subr.mxu0 0.0
  %965 = vmatpush1.msra.mxu0 0.0
  %966 = vmatprep.subr.mxu0 0.0
  %967 = vmatpush1.msra.mxu0 0.0
  %968 = vmatprep.subr.mxu0 0.0
  %969 = vmatpush1.msra.mxu0 0.0
  %970 = vmatprep.subr.mxu0 0.0
  %971 = vmatpush1.msra.mxu0 0.0
  %972 = vmatprep.subr.mxu0 0.0
  %973 = vmatpush1.msra.mxu0 0.0
  %974 = vmatprep.subr.mxu0 0.0
  %975 = vmatpush1.msra.mxu0 0.0
  %976 = vmatprep.subr.mxu0 0.0
  %977 = vmatpush1.msra.mxu0 0.0
  %978 = vmatprep.subr.mxu0 0.0
  %979 = vmatpush1.msra.mxu0 0.0
  %980 = vmatprep.subr.mxu0 0.0
  %981 = vmatpush1.msra.mxu0 0.0
  %982 = vmatprep.mubr.f32.mxu0 0.0
  %983 = vmatmul.mubr.f32.gmra.mrb[0].mxu0 %v916
  %v984 = vpop.f32.mrb[0].mxu0
  %v985 = vadd.f32 %v913, %v984
  %v986 = vpop.f32.mrb[0].mxu0
  %987 = vdwg.mxu0
  %v988 = vmax.f32 %v985, 0.0
  %s989 = scalar_lea.vmem %s6, 96
  %v990 = vld [vmem:[%s989] sm:$0xff]
  %v991 = vld [vmem:[%s989 + $0x8] sm:$0xff]
  %v992 = vld [vmem:[%s989 + $0x10] sm:$0xff]
  %v993 = vld [vmem:[%s989 + $0x18] sm:$0xff]
  %s994 = scalar_lea.vmem %s7, 3
  %v995 = vld [vmem:[%s994] sm:$0x1]
  %v997 = vlaneseq
  %v998 = vshrl.u32 %v997, 7
  %v999 = vsub.s32 0, %v998
  %v1000 = vrot.slane %v995, %v999
  %v1003 = vsel %vm127, %v988, 0
  %1005 = vmatprep.subr.mxu0 0.0
  %1006 = vmatpush1.msra.mxu0 %v990
  %1007 = vmatprep.subr.mxu0 0.0
  %1008 = vmatpush1.msra.mxu0 %v991
  %1009 = vmatprep.subr.mxu0 0.0
  %1010 = vmatpush1.msra.mxu0 %v992
  %1011 = vmatprep.subr.mxu0 0.0
  %1012 = vmatpush1.msra.mxu0 %v993
  %1013 = vmatprep.subr.mxu0 0.0
  %1014 = vmatpush1.msra.mxu0 0.0
  %1015 = vmatprep.subr.mxu0 0.0
  %1016 = vmatpush1.msra.mxu0 0.0
  %1017 = vmatprep.subr.mxu0 0.0
  %1018 = vmatpush1.msra.mxu0 0.0
  %1019 = vmatprep.subr.mxu0 0.0
  %1020 = vmatpush1.msra.mxu0 0.0
  %1021 = vmatprep.subr.mxu0 0.0
  %1022 = vmatpush1.msra.mxu0 0.0
  %1023 = vmatprep.subr.mxu0 0.0
  %1024 = vmatpush1.msra.mxu0 0.0
  %1025 = vmatprep.subr.mxu0 0.0
  %1026 = vmatpush1.msra.mxu0 0.0
  %1027 = vmatprep.subr.mxu0 0.0
  %1028 = vmatpush1.msra.mxu0 0.0
  %1029 = vmatprep.subr.mxu0 0.0
  %1030 = vmatpush1.msra.mxu0 0.0
  %1031 = vmatprep.subr.mxu0 0.0
  %1032 = vmatpush1.msra.mxu0 0.0
  %1033 = vmatprep.subr.mxu0 0.0
  %1034 = vmatpush1.msra.mxu0 0.0
  %1035 = vmatprep.subr.mxu0 0.0
  %1036 = vmatpush1.msra.mxu0 0.0
  %1037 = vmatprep.subr.mxu0 0.0
  %1038 = vmatpush1.msra.mxu0 0.0
  %1039 = vmatprep.subr.mxu0 0.0
  %1040 = vmatpush1.msra.mxu0 0.0
  %1041 = vmatprep.subr.mxu0 0.0
  %1042 = vmatpush1.msra.mxu0 0.0
  %1043 = vmatprep.subr.mxu0 0.0
  %1044 = vmatpush1.msra.mxu0 0.0
  %1045 = vmatprep.subr.mxu0 0.0
  %1046 = vmatpush1.msra.mxu0 0.0
  %1047 = vmatprep.subr.mxu0 0.0
  %1048 = vmatpush1.msra.mxu0 0.0
  %1049 = vmatprep.subr.mxu0 0.0
  %1050 = vmatpush1.msra.mxu0 0.0
  %1051 = vmatprep.subr.mxu0 0.0
  %1052 = vmatpush1.msra.mxu0 0.0
  %1053 = vmatprep.subr.mxu0 0.0
  %1054 = vmatpush1.msra.mxu0 0.0
  %1055 = vmatprep.subr.mxu0 0.0
  %1056 = vmatpush1.msra.mxu0 0.0
  %1057 = vmatprep.subr.mxu0 0.0
  %1058 = vmatpush1.msra.mxu0 0.0
  %1059 = vmatprep.subr.mxu0 0.0
  %1060 = vmatpush1.msra.mxu0 0.0
  %1061 = vmatprep.subr.mxu0 0.0
  %1062 = vmatpush1.msra.mxu0 0.0
  %1063 = vmatprep.subr.mxu0 0.0
  %1064 = vmatpush1.msra.mxu0 0.0
  %1065 = vmatprep.subr.mxu0 0.0
  %1066 = vmatpush1.msra.mxu0 0.0
  %1067 = vmatprep.subr.mxu0 0.0
  %1068 = vmatpush1.msra.mxu0 0.0
  %1069 = vmatprep.mubr.f32.mxu0 0.0
  %1070 = vmatmul.mubr.f32.gmra.mrb[0].mxu0 %v1003
  %v1071 = vpop.f32.mrb[0].mxu0
  %v1072 = vadd.f32 %v1000, %v1071
  %v1073 = vpop.f32.mrb[0].mxu0
  %1074 = vdwg.mxu0
  %v1075 = vmul.f32 %v1072, 1.442695
  %v1076 = vpow.pop %v1075
  %v1077 = vmul.f32 %v819, %v1076
  %1079 = vrot.lane.b32.xlu0 %v1072, 120
  %v1080 = vpop.permute.xlu0 %1079
  %v1082 = vadd.f32 %v1077, %v1080
  %v1083 = vadd.f32 %v820, %v1072
  %1084 = vst.msk [vmem:[%s8] sm:$0xff] %vm41, %v1082
  %v1085 = vsel %vm41, %v1083, 0.0
  %1086 = vadd.xlane.f32.xlu0 %v1085
  %v1087 = vpop.xlane.xlu0 %1086
  %vm1088 = vcmask 7168
  %1089 = vst.msk [vmem:[%s9] sm:$0xff] %vm1088, %v1087
  // Predicated region
  $region34: #{normalizing_flow_forward.1} parent=0 // pred_check
    _
  $region35: #{normalizing_flow_forward.1} parent=0 // pred_check_branch
    %1091 = sbr.rel (0) target = $region37
  $region36: #{normalizing_flow_forward.1} parent=0 // pred_region
    _
  $region37: #{normalizing_flow_forward.1} parent=0 // pred_fallthru
    _
  // Predicated region
  $region38: #{normalizing_flow_forward.1} parent=0 // pred_check
    _
  $region39: #{normalizing_flow_forward.1} parent=0 // pred_check_branch
    %1093 = sbr.rel (0) target = $region41
  $region40: #{normalizing_flow_forward.1} parent=0 // pred_region
    _
  $region41: #{normalizing_flow_forward.1} parent=0 // pred_fallthru
    _
  // Predicated region
  $region42: #{normalizing_flow_forward.1} parent=0 // pred_check
    _
  $region43: #{normalizing_flow_forward.1} parent=0 // pred_check_branch
    %1095 = sbr.rel (0) target = $region45
  $region44: #{normalizing_flow_forward.1} parent=0 // pred_region
    _
  $region45: #{normalizing_flow_forward.1} parent=0 // pred_fallthru
    _
  // Predicated region
  $region46: #{normalizing_flow_forward.1} parent=0 // pred_check
    _
  $region47: #{normalizing_flow_forward.1} parent=0 // pred_check_branch
    %1097 = sbr.rel (0) target = $region49
  $region48: #{normalizing_flow_forward.1} parent=0 // pred_region
    _
  $region49: #{normalizing_flow_forward.1} parent=0 // pred_fallthru
    _

</llo_original>
